<compile_context>
chip_gen: v5e
topology: v5e:2x2
jax: 0.10.0
libtpu: 0.0.40
codegen_flags: <defaults>
</compile_context>

<pallas_src>
import jax
import jax.numpy as jnp
from jax import lax
from jax.experimental import pallas as pl
from jax.experimental.pallas import tpu as pltpu


def _round_up(v, m):
    return ((v + m - 1) // m) * m


def _sublane_multiple(dtype):
    # Sublane packing: f32 -> 8, bf16 -> 16, int8/fp8 -> 32.
    return {4: 8, 2: 16, 1: 32}.get(jnp.dtype(dtype).itemsize, 8)


def _linear_xh_kernel(x_ref, h_ref, wx_ref, wh_ref, b_ref, o_ref):
    # y = x @ wx.T + h @ wh.T + b   (weights kept in PyTorch (N, K) layout).
    dn = (((1,), (1,)), ((), ()))
    acc = lax.dot_general(x_ref[...], wx_ref[...], dimension_numbers=dn,
                          preferred_element_type=jnp.float32)
    acc = acc + lax.dot_general(h_ref[...], wh_ref[...], dimension_numbers=dn,
                                preferred_element_type=jnp.float32)
    o_ref[...] = (acc + b_ref[...].astype(jnp.float32)).astype(o_ref.dtype)


def _linear_x_kernel(x_ref, wx_ref, b_ref, o_ref):
    dn = (((1,), (1,)), ((), ()))
    acc = lax.dot_general(x_ref[...], wx_ref[...], dimension_numbers=dn,
                          preferred_element_type=jnp.float32)
    o_ref[...] = (acc + b_ref[...].astype(jnp.float32)).astype(o_ref.dtype)


def local_net_forward(x, h, weight, bias, *, tm_max=512,
                      vmem_budget_bytes=8 << 20):
    """x: (B, S, input_shape), h: (B, S, h_dim) or None.

    weight: (output_dim, input_shape + h_dim)  -- PyTorch nn.Linear layout.
    bias:   (output_dim,)
    Returns (B, S, output_dim).
    """
    B, S, Kx = x.shape
    N, K_total = weight.shape
    Kh = 0 if h is None else h.shape[2]
    assert K_total == Kx + Kh, (weight.shape, Kx, Kh)

    M = B * S
    itemsize = jnp.dtype(x.dtype).itemsize
    sub = _sublane_multiple(x.dtype)

    # Pick TM: largest sublane-aligned tile (<= tm_max) whose double-buffered
    # footprint (x, h, out tiles x2) plus the resident weights/bias fits the
    # conservative cross-generation VMEM budget.
    resident = (N * K_total + N) * itemsize
    tm = _round_up(min(tm_max, _round_up(M, sub)), sub)
    while tm > sub and resident + 2 * tm * (K_total + N) * itemsize > vmem_budget_bytes:
        tm -= sub
    tm = max(tm, sub)

    m_pad = _round_up(M, tm)
    grid = (m_pad // tm,)

    x2d = x.reshape(M, Kx)
    if m_pad != M:
        x2d = jnp.pad(x2d, ((0, m_pad - M), (0, 0)))
    b2d = bias.reshape(1, N)

    cost = pl.CostEstimate(
        flops=2 * M * K_total * N,
        transcendentals=0,
        bytes_accessed=(M * K_total + N * K_total + M * N + N) * itemsize,
    )
    cparams = pltpu.CompilerParams(dimension_semantics=("parallel",))

    if h is None:
        out = pl.pallas_call(
            _linear_x_kernel,
            out_shape=jax.ShapeDtypeStruct((m_pad, N), x.dtype),
            grid=grid,
            in_specs=[
                pl.BlockSpec((tm, Kx), lambda i: (i, 0)),   # x tile (streamed)
                pl.BlockSpec((N, Kx), lambda i: (0, 0)),    # weight (resident)
                pl.BlockSpec((1, N), lambda i: (0, 0)),     # bias   (resident)
            ],
            out_specs=pl.BlockSpec((tm, N), lambda i: (i, 0)),
            compiler_params=cparams,
            cost_estimate=cost,
        )(x2d, weight, b2d)
    else:
        h2d = h.reshape(M, Kh)
        if m_pad != M:
            h2d = jnp.pad(h2d, ((0, m_pad - M), (0, 0)))
        # One-time tiny slices of the (N, K) weight -- replaces the full
        # activation concat with two in-kernel dots.
        w_x = weight[:, :Kx]
        w_h = weight[:, Kx:]
        out = pl.pallas_call(
            _linear_xh_kernel,
            out_shape=jax.ShapeDtypeStruct((m_pad, N), x.dtype),
            grid=grid,
            in_specs=[
                pl.BlockSpec((tm, Kx), lambda i: (i, 0)),   # x tile (streamed)
                pl.BlockSpec((tm, Kh), lambda i: (i, 0)),   # h tile (streamed)
                pl.BlockSpec((N, Kx), lambda i: (0, 0)),    # w_x (resident)
                pl.BlockSpec((N, Kh), lambda i: (0, 0)),    # w_h (resident)
                pl.BlockSpec((1, N), lambda i: (0, 0)),     # bias (resident)
            ],
            out_specs=pl.BlockSpec((tm, N), lambda i: (i, 0)),
            compiler_params=cparams,
            cost_estimate=cost,
        )(x2d, h2d, w_x, w_h, b2d)

    if m_pad != M:
        out = out[:M]
    return out.reshape(B, S, N)


def _init_linear_params(key, in_features, out_features, dtype=jnp.float32):
    # Mimic nn.Linear default init (uniform +/- 1/sqrt(fan_in)).
    k_w, k_b = jax.random.split(key)
    bound = 1.0 / jnp.sqrt(jnp.asarray(in_features, dtype))
    weight = jax.random.uniform(
        k_w, (out_features, in_features), dtype, minval=-bound, maxval=bound)
    bias = jax.random.uniform(
        k_b, (out_features,), dtype, minval=-bound, maxval=bound)
    return weight, bias


if __name__ == "__main__":
    # Small shapes consistent with the module's forward:
    #   input_shape=24, h_dim=8 -> in_features = 32; output_dim=32.
    B, S = 2, 8
    input_shape, h_dim, output_dim = 24, 8, 32

    key = jax.random.PRNGKey(0)
    k_x, k_h, k_p, k_p2 = jax.random.split(key, 4)

    x = jax.random.normal(k_x, (B, S, input_shape), jnp.float32)
    h = jax.random.normal(k_h, (B, S, h_dim), jnp.float32)
    weight, bias = _init_linear_params(k_p, input_shape + h_dim, output_dim)

    # Path with h (cat fused into two in-kernel dots).
    y = local_net_forward(x, h, weight, bias)
    y = jax.block_until_ready(y)
    ref = jnp.concatenate([x, h], axis=2) @ weight.T + bias
    assert y.shape == (B, S, output_dim)
    assert jnp.allclose(y, ref, atol=1e-5, rtol=1e-5)

    # Path without h (h=None branch of forward).
    weight2, bias2 = _init_linear_params(k_p2, input_shape, output_dim)
    y2 = local_net_forward(x, None, weight2, bias2)
    y2 = jax.block_until_ready(y2)
    ref2 = x @ weight2.T + bias2
    assert jnp.allclose(y2, ref2, atol=1e-5, rtol=1e-5)

    print("KERNEL_OK")
</pallas_src>

<mosaic_0001>
module attributes {stable_mosaic.version = 11 : i64} {
  func.func @_linear_xh_kernel(%arg0: i32, %arg1: memref<16x24xf32, #tpu.memory_space<vmem>>, %arg2: memref<16x8xf32, #tpu.memory_space<vmem>>, %arg3: memref<32x24xf32, #tpu.memory_space<vmem>>, %arg4: memref<32x8xf32, #tpu.memory_space<vmem>>, %arg5: memref<1x32xf32, #tpu.memory_space<vmem>>, %arg6: memref<16x32xf32, #tpu.memory_space<vmem>>) attributes {dimension_semantics = [#tpu.dimension_semantics<parallel>], iteration_bounds = array<i64: 1>, scalar_prefetch = 0 : i64, scratch_operands = 0 : i64, tpu.core_type = #tpu.core_type<tc>, window_params = [{transform_indices = @transform_0, window_bounds = array<i64: 16, 24>}, {transform_indices = @transform_1, window_bounds = array<i64: 16, 8>}, {pipeline_mode = #tpu.pipeline_mode<synchronous>, transform_indices = @transform_2, window_bounds = array<i64: 32, 24>}, {pipeline_mode = #tpu.pipeline_mode<synchronous>, transform_indices = @transform_3, window_bounds = array<i64: 32, 8>}, {pipeline_mode = #tpu.pipeline_mode<synchronous>, transform_indices = @transform_4, window_bounds = array<i64: 1, 32>}, {transform_indices = @transform_5, window_bounds = array<i64: 16, 32>}]} {
    %c0 = arith.constant 0 : index
    %c0_0 = arith.constant 0 : index
    %0 = vector.load %arg1[%c0, %c0_0] : memref<16x24xf32, #tpu.memory_space<vmem>>, vector<16x24xf32>
    %c0_1 = arith.constant 0 : index
    %c0_2 = arith.constant 0 : index
    %1 = vector.load %arg3[%c0_1, %c0_2] : memref<32x24xf32, #tpu.memory_space<vmem>>, vector<32x24xf32>
    %cst = arith.constant dense<0.000000e+00> : vector<16x32xf32>
    %2 = tpu.matmul %0, %1, %cst {dimension_numbers = #tpu.dot_dimension_numbers<[1], [1], [0], [0], [0, 0, 1, 0], [], []>} : vector<16x24xf32>, vector<32x24xf32>, vector<16x32xf32> -> vector<16x32xf32>
    %c0_3 = arith.constant 0 : index
    %c0_4 = arith.constant 0 : index
    %3 = vector.load %arg2[%c0_3, %c0_4] : memref<16x8xf32, #tpu.memory_space<vmem>>, vector<16x8xf32>
    %c0_5 = arith.constant 0 : index
    %c0_6 = arith.constant 0 : index
    %4 = vector.load %arg4[%c0_5, %c0_6] : memref<32x8xf32, #tpu.memory_space<vmem>>, vector<32x8xf32>
    %cst_7 = arith.constant dense<0.000000e+00> : vector<16x32xf32>
    %5 = tpu.matmul %3, %4, %cst_7 {dimension_numbers = #tpu.dot_dimension_numbers<[1], [1], [0], [0], [0, 0, 1, 0], [], []>} : vector<16x8xf32>, vector<32x8xf32>, vector<16x32xf32> -> vector<16x32xf32>
    %6 = arith.addf %2, %5 : vector<16x32xf32>
    %c0_8 = arith.constant 0 : index
    %c0_9 = arith.constant 0 : index
    %7 = vector.load %arg5[%c0_8, %c0_9] : memref<1x32xf32, #tpu.memory_space<vmem>>, vector<1x32xf32>
    %8 = vector.broadcast %7 : vector<1x32xf32> to vector<16x32xf32>
    %9 = arith.addf %6, %8 : vector<16x32xf32>
    %c0_10 = arith.constant 0 : index
    %c0_11 = arith.constant 0 : index
    %10 = vector.load %arg6[%c0_10, %c0_11] : memref<16x32xf32, #tpu.memory_space<vmem>>, vector<16x32xf32>
    tpu.vector_store %arg6[%c0_10, %c0_11], %9 {strides = array<i32>} : memref<16x32xf32, #tpu.memory_space<vmem>>, vector<16x32xf32>,
    return
  }
  func.func @transform_0(%arg0: i32) -> (i32, i32) {
    %c0_i32 = arith.constant 0 : i32
    %c0_i32_0 = arith.constant 0 : i32
    return %arg0, %c0_i32 : i32, i32
  }
  func.func @transform_1(%arg0: i32) -> (i32, i32) {
    %c0_i32 = arith.constant 0 : i32
    %c0_i32_0 = arith.constant 0 : i32
    return %arg0, %c0_i32 : i32, i32
  }
  func.func @transform_2(%arg0: i32) -> (i32, i32) {
    %c0_i32 = arith.constant 0 : i32
    %c0_i32_0 = arith.constant 0 : i32
    %c0_i32_1 = arith.constant 0 : i32
    return %c0_i32, %c0_i32_0 : i32, i32
  }
  func.func @transform_3(%arg0: i32) -> (i32, i32) {
    %c0_i32 = arith.constant 0 : i32
    %c0_i32_0 = arith.constant 0 : i32
    %c0_i32_1 = arith.constant 0 : i32
    return %c0_i32, %c0_i32_0 : i32, i32
  }
  func.func @transform_4(%arg0: i32) -> (i32, i32) {
    %c0_i32 = arith.constant 0 : i32
    %c0_i32_0 = arith.constant 0 : i32
    %c0_i32_1 = arith.constant 0 : i32
    return %c0_i32, %c0_i32_0 : i32, i32
  }
  func.func @transform_5(%arg0: i32) -> (i32, i32) {
    %c0_i32 = arith.constant 0 : i32
    %c0_i32_0 = arith.constant 0 : i32
    return %arg0, %c0_i32 : i32, i32
  }
}

</mosaic_0001>

<llo_original>
// kernel: tpu_custom_call.1
$region0: #{tpu_custom_call.1}
  #allocation0 [shape = 'u32[]', space=smem, size = 0x4, offset = 0x4, fixed_abs, tag = 'smem constant byte address 0x4 - core index']
  #allocation1 [shape = 'u32[72,128]{1,0:T(1,128)}', space=vmem, size = 0x9000, scoped, tag = 'internal scratch']
  %s0 = inlined_call_operand.vmem [shape: f32[16,24], index: 0, kind: input, shape index: {}]
  %s1 = inlined_call_operand.vmem [shape: f32[16,8], index: 1, kind: input, shape index: {}]
  %s2 = inlined_call_operand.vmem [shape: f32[32,24], index: 2, kind: input, shape index: {}]
  %s3 = inlined_call_operand.vmem [shape: f32[32,8], index: 3, kind: input, shape index: {}]
  %s4 = inlined_call_operand.vmem [shape: f32[1,32], index: 4, kind: input, shape index: {}]
  %s5 = inlined_call_operand.hbm [shape: f32[16,32], index: 5, kind: output, shape index: {}]
  %s6 = sld [smem:[#allocation0]]
  $region30: #{tpu_custom_call.1} parent=0
    _
  %s8 = ssub.s32 1, %s6
  %s9 = scalar_select 0, %s8, %s6
  $region1: #{tpu_custom_call.1} parent=0
    #allocation2 [shape = 'u8[8192]{0}', space=vmem, size = 0x2000, scoped, tag = 'output window, operand 0, single buffered']
    #allocation3 [shape = 's32[1]{0}', space=sflag, size = 0x4, scoped, tag = 'scoped memory for tpu_custom_call.1']
    %10 = vsyncpa [#allocation3], 0
    // Predicated region
    $region2: #{tpu_custom_call.1} parent=1 // pred_check
      _
    $region3: #{tpu_custom_call.1} parent=1 // pred_check_branch
      %12 = sbr.rel (0) target = $region5
    $region4: #{tpu_custom_call.1} parent=1 // pred_region
      _
    $region5: #{tpu_custom_call.1} parent=1 // pred_fallthru
      _
    // Predicated region
    $region6: #{tpu_custom_call.1} parent=1 // pred_check
      _
    $region7: #{tpu_custom_call.1} parent=1 // pred_check_branch
      %14 = sbr.rel (0) target = $region9
    $region8: #{tpu_custom_call.1} parent=1 // pred_region
      _
    $region9: #{tpu_custom_call.1} parent=1 // pred_fallthru
      _
    // Predicated region
    $region10: #{tpu_custom_call.1} parent=1 // pred_check
      _
    $region11: #{tpu_custom_call.1} parent=1 // pred_check_branch
      %16 = sbr.rel (0) target = $region13
    $region12: #{tpu_custom_call.1} parent=1 // pred_region
      _
    $region13: #{tpu_custom_call.1} parent=1 // pred_fallthru
      _
    // Predicated region
    $region14: #{tpu_custom_call.1} parent=1 // pred_check
      _
    $region15: #{tpu_custom_call.1} parent=1 // pred_check_branch
      %18 = sbr.rel (0) target = $region17
    $region16: #{tpu_custom_call.1} parent=1 // pred_region
      _
    $region17: #{tpu_custom_call.1} parent=1 // pred_fallthru
      _
    // Predicated region
    $region18: #{tpu_custom_call.1} parent=1 // pred_check
      _
    $region19: #{tpu_custom_call.1} parent=1 // pred_check_branch
      %20 = sbr.rel (0) target = $region21
    $region20: #{tpu_custom_call.1} parent=1 // pred_region
      _
    $region21: #{tpu_custom_call.1} parent=1 // pred_fallthru
      _
    %v21 = vld [vmem:[%s0] sm:$0xff]
    %v22 = vld [vmem:[%s0 + $0x8] sm:$0xff]
    %v23 = vld [vmem:[%s2] sm:$0xff]
    %v24 = vld [vmem:[%s2 + $0x8] sm:$0xff]
    %v25 = vld [vmem:[%s2 + $0x10] sm:$0xff]
    %v26 = vld [vmem:[%s2 + $0x18] sm:$0xff]
    %v27 = vld [vmem:[%s1] sm:$0xff]
    %v28 = vld [vmem:[%s1 + $0x8] sm:$0xff]
    %v29 = vld [vmem:[%s3] sm:$0xff]
    %v30 = vld [vmem:[%s3 + $0x8] sm:$0xff]
    %v31 = vld [vmem:[%s3 + $0x10] sm:$0xff]
    %v32 = vld [vmem:[%s3 + $0x18] sm:$0xff]
    %vm33 = vcmask 64512
    %v35 = vsel %vm33, %v27, 0
    %v38 = vsel %vm33, %v28, 0
    %v41 = vsel %vm33, %v29, 0
    %v44 = vsel %vm33, %v30, 0
    %v47 = vsel %vm33, %v31, 0
    %v50 = vsel %vm33, %v32, 0
    %52 = vmatpush.xpose.msra.mxu0 0.0
    %53 = vmatpush.xpose.msra.mxu0 0.0
    %54 = vmatpush.xpose.msra.mxu0 0.0
    %55 = vmatpush.xpose.msra.mxu0 0.0
    %56 = vmatpush.xpose.msra.mxu0 0.0
    %57 = vmatpush.xpose.msra.mxu0 0.0
    %58 = vmatpush.xpose.msra.mxu0 0.0
    %59 = vmatpush.xpose.msra.mxu0 0.0
    %60 = vmatpush.xpose.msra.mxu0 0.0
    %61 = vmatpush.xpose.msra.mxu0 0.0
    %62 = vmatpush.xpose.msra.mxu0 0.0
    %63 = vmatpush.xpose.msra.mxu0 0.0
    %64 = vmatpush.xpose.msra.mxu0 %v50
    %65 = vmatpush.xpose.msra.mxu0 %v47
    %66 = vmatpush.xpose.msra.mxu0 %v44
    %67 = vmatpush.xpose.msra.mxu0 %v41
    %68 = vmatmul.f32.gmra.mxu0 %v35
    %v69 = vpop.f32.mrf.mxu0
    %v70 = vadd.f32 0.0, %v69
    %71 = vmatmul.f32.gmra.mxu0 %v38
    %v72 = vpop.f32.mrf.mxu0
    %v73 = vadd.f32 0.0, %v72
    %74 = vdwg.mxu0
    %vm75 = vcmask 195584
    %v77 = vsel %vm75, %v21, 0
    %v80 = vsel %vm75, %v22, 0
    %v83 = vsel %vm75, %v23, 0
    %v86 = vsel %vm75, %v24, 0
    %v89 = vsel %vm75, %v25, 0
    %v92 = vsel %vm75, %v26, 0
    %94 = vmatpush.xpose.msra.mxu0 0.0
    %95 = vmatpush.xpose.msra.mxu0 0.0
    %96 = vmatpush.xpose.msra.mxu0 0.0
    %97 = vmatpush.xpose.msra.mxu0 0.0
    %98 = vmatpush.xpose.msra.mxu0 0.0
    %99 = vmatpush.xpose.msra.mxu0 0.0
    %100 = vmatpush.xpose.msra.mxu0 0.0
    %101 = vmatpush.xpose.msra.mxu0 0.0
    %102 = vmatpush.xpose.msra.mxu0 0.0
    %103 = vmatpush.xpose.msra.mxu0 0.0
    %104 = vmatpush.xpose.msra.mxu0 0.0
    %105 = vmatpush.xpose.msra.mxu0 0.0
    %106 = vmatpush.xpose.msra.mxu0 %v92
    %107 = vmatpush.xpose.msra.mxu0 %v89
    %108 = vmatpush.xpose.msra.mxu0 %v86
    %109 = vmatpush.xpose.msra.mxu0 %v83
    %110 = vmatmul.f32.gmra.mxu0 %v77
    %v111 = vpop.f32.mrf.mxu0
    %v112 = vadd.f32 %v70, %v111
    %113 = vmatmul.f32.gmra.mxu0 %v80
    %v114 = vpop.f32.mrf.mxu0
    %v115 = vadd.f32 %v73, %v114
    %116 = vdwg.mxu0
    %v117 = vld [vmem:[%s4] sm:$0x1]
    %v119 = vperm.slane %v117, 0
    %v121 = vadd.f32 %v112, %v119
    %v122 = vadd.f32 %v115, %v119
    %vm123 = vcmask 261120
    %124 = vst.msk [vmem:[#allocation2] sm:$0xff] %vm123, %v121
    %125 = vst.msk [vmem:[#allocation2 + $0x8] sm:$0xff] %vm123, %v122
    // Predicated region
    $region22: #{tpu_custom_call.1} parent=1 // pred_check
      _
    $region23: #{tpu_custom_call.1} parent=1 // pred_check_branch
      %127 = sbr.rel (0) target = $region25
    $region24: #{tpu_custom_call.1} parent=1 // pred_region
      %129 = vsyncadd [#allocation3], 0
      %s130 = sshll.u32 [#allocation2], 4
      %s131 = int_to_ptr.vmem [resolvable:$true] %s130
      %s132 = sshll.u32 %s5, 4
      %s133 = int_to_ptr.hbm [resolvable:$true] %s132
      %138 = dma.vmem_to_hbm [thread:$0]  %s131, 256, %s133, [#allocation3], 128, 128, 8
    $region25: #{tpu_custom_call.1} parent=1 // pred_fallthru
      _
    // Predicated region
    $region26: #{tpu_custom_call.1} parent=1 // pred_check
      _
    $region27: #{tpu_custom_call.1} parent=1 // pred_check_branch
      %140 = sbr.rel (0) target = $region29
    $region28: #{tpu_custom_call.1} parent=1 // pred_region
      %142 = dma.done [#allocation3], 256
    $region29: #{tpu_custom_call.1} parent=1 // pred_fallthru
      _
    %143 = vsyncpa [#allocation3], 1

</llo_original>
